<compile_context>
chip_gen: v7x
topology: tpu7x:2x2x1
jax: 0.10.0
libtpu: 0.0.40
codegen_flags: <defaults>
</compile_context>

<pallas_src>
import functools

import jax
import jax.numpy as jnp
from jax.experimental import pallas as pl
from jax.experimental.pallas import tpu as pltpu


# ----------------------------------------------------------------------------
# Per-batch fused MHA kernel (one grid step == one batch element).
#   x_ref:    (T, D)        input block (batch dim squeezed)
#   wq_ref:   (H, D, hd)    query weights, pre-transposed, scale folded in
#   wk_ref:   (H, D, hd)
#   wv_ref:   (H, D, hd)
#   [bqkv_ref:(3, H, 1, hd) only when qkv_bias=True, query bias scale-folded]
#   wo_ref:   (H, hd, D)    out_proj weight, pre-transposed & head-split
#   bo_ref:   (1, D)        out_proj bias
#   o_ref:    (T, D)
# ----------------------------------------------------------------------------
def _mha_kernel(*refs, num_heads, use_causal_mask, qkv_bias):
    if qkv_bias:
        x_ref, wq_ref, wk_ref, wv_ref, bqkv_ref, wo_ref, bo_ref, o_ref = refs
    else:
        x_ref, wq_ref, wk_ref, wv_ref, wo_ref, bo_ref, o_ref = refs
        bqkv_ref = None

    T, D = x_ref.shape
    H = num_heads

    x = x_ref[...]                                        # (T, D)
    xh = jnp.broadcast_to(x[None], (H, T, D))             # head-batched view, hoisted

    # Per-head projections — batched over heads, no lane slicing.
    q = jnp.einsum('htd,hdk->htk', xh, wq_ref[...],
                   preferred_element_type=jnp.float32)    # (H, T, hd), scale folded
    k = jnp.einsum('htd,hdk->htk', xh, wk_ref[...],
                   preferred_element_type=jnp.float32)
    v = jnp.einsum('htd,hdk->htk', xh, wv_ref[...],
                   preferred_element_type=jnp.float32)
    if qkv_bias:
        q = q + bqkv_ref[0]
        k = k + bqkv_ref[1]
        v = v + bqkv_ref[2]

    # Scores: 1/sqrt(hd) already folded into wq (wrapper-side).
    s = jnp.einsum('hqd,hkd->hqk', q, k,
                   preferred_element_type=jnp.float32)    # (H, T, T)
    if use_causal_mask:
        qi = jax.lax.broadcasted_iota(jnp.int32, (T, T), 0)
        ki = jax.lax.broadcasted_iota(jnp.int32, (T, T), 1)
        # Large finite negative instead of -inf: safe if this is ever extended
        # to padding/key masks where an entire row could be masked.
        s = jnp.where((ki > qi)[None], -1e30, s)

    # Manual softmax; reciprocal goes to the EUP slot (approx is well within tol).
    m = jnp.max(s, axis=-1, keepdims=True)
    e = jnp.exp(s - m)
    p = e * pl.reciprocal(jnp.sum(e, axis=-1, keepdims=True), approx=True)
    # dropout (eval / p=0.0) == identity

    ctx = jnp.einsum('hqk,hkd->hqd', p, v,
                     preferred_element_type=jnp.float32)  # (H, T, hd)

    # out_proj without a head concat: concat_h(ctx_h) @ Wo == sum_h ctx_h @ Wo_h.
    out = jnp.einsum('hqd,hdo->hqo', ctx, wo_ref[...],
                     preferred_element_type=jnp.float32).sum(axis=0)   # (T, D)
    o_ref[...] = (out + bo_ref[...]).astype(o_ref.dtype)


# ----------------------------------------------------------------------------
# Wrapper: trace-time (free) weight transforms + grid over batch.
# Params are in PyTorch nn.Linear layout: w* (out_features, in_features),
# b* (out_features,).
# ----------------------------------------------------------------------------
def multi_head_attention(x, params, *, num_heads, use_causal_mask=False,
                         qkv_bias=False):
    B, T, D = x.shape
    assert D % num_heads == 0, 'd_out must be divisible by num_heads'
    H = num_heads
    hd = D // H
    scale = 1.0 / float(hd) ** 0.5

    # --- trace-time weight transforms: transpose, fold scale, split heads ---
    def per_head(w_t):                       # w_t: (D_in, D_out)
        return w_t.reshape(D, H, hd).transpose(1, 0, 2)   # (H, D, hd)

    wq_h = per_head(params["wq"].T * scale)  # fold 1/sqrt(hd) into Q weights
    wk_h = per_head(params["wk"].T)
    wv_h = per_head(params["wv"].T)
    wo_h = params["wo"].T.reshape(H, hd, D)  # (H, hd, D)
    bo = params["bo"].reshape(1, D)

    args = [x, wq_h, wk_h, wv_h]
    in_specs = [
        pl.BlockSpec((None, T, D), lambda b: (b, 0, 0)),   # x: one batch per step
        pl.BlockSpec((H, D, hd), lambda b: (0, 0, 0)),     # wq_h (resident)
        pl.BlockSpec((H, D, hd), lambda b: (0, 0, 0)),     # wk_h
        pl.BlockSpec((H, D, hd), lambda b: (0, 0, 0)),     # wv_h
    ]
    if qkv_bias:
        bqkv_h = jnp.stack([params["bq"] * scale, params["bk"], params["bv"]]
                           ).reshape(3, H, 1, hd)
        args.append(bqkv_h)
        in_specs.append(pl.BlockSpec((3, H, 1, hd), lambda b: (0, 0, 0, 0)))
    args += [wo_h, bo]
    in_specs += [
        pl.BlockSpec((H, hd, D), lambda b: (0, 0, 0)),     # wo_h
        pl.BlockSpec((1, D), lambda b: (0, 0)),            # bo
    ]

    kern = functools.partial(_mha_kernel, num_heads=H,
                             use_causal_mask=use_causal_mask,
                             qkv_bias=qkv_bias)
    return pl.pallas_call(
        kern,
        grid=(B,),
        in_specs=in_specs,
        out_specs=pl.BlockSpec((None, T, D), lambda b: (b, 0, 0)),
        out_shape=jax.ShapeDtypeStruct((B, T, D), x.dtype),
        compiler_params=pltpu.CompilerParams(
            dimension_semantics=("parallel",)),   # shards batch across TCs on v7x
    )(*args)


# ----------------------------------------------------------------------------
# Pure-JAX reference (mirrors the PyTorch module) for a correctness check.
# ----------------------------------------------------------------------------
def mha_reference(x, params, num_heads, use_causal_mask=False, qkv_bias=False):
    B, T, D = x.shape
    hd = D // num_heads
    hp = jax.lax.Precision.HIGHEST
    q = jnp.einsum('btd,od->bto', x, params["wq"], precision=hp)
    k = jnp.einsum('btd,od->bto', x, params["wk"], precision=hp)
    v = jnp.einsum('btd,od->bto', x, params["wv"], precision=hp)
    if qkv_bias:
        q = q + params["bq"]
        k = k + params["bk"]
        v = v + params["bv"]

    def split_heads(a):
        return a.reshape(B, T, num_heads, hd).transpose(0, 2, 1, 3)

    q, k, v = map(split_heads, (q, k, v))                  # (B, H, T, hd)
    s = jnp.einsum('bhqd,bhkd->bhqk', q, k, precision=hp)
    if use_causal_mask:
        mask = jnp.triu(jnp.ones((T, T), bool), k=1)
        s = jnp.where(mask[None, None], -jnp.inf, s)
    p = jax.nn.softmax(s / hd ** 0.5, axis=-1)
    ctx = jnp.einsum('bhqk,bhkd->bhqd', p, v, precision=hp)
    ctx = ctx.transpose(0, 2, 1, 3).reshape(B, T, D)
    return jnp.einsum('btd,od->bto', ctx, params["wo"], precision=hp) \
        + params["bo"]


# ----------------------------------------------------------------------------
if __name__ == "__main__":
    # Shapes consistent with the ALSTM usage of this module:
    # d_in = d_out = hidden_size = 32, context_length = 8, n_heads = 2, B = 2.
    B, T, D = 2, 8, 32
    num_heads = 2

    key = jax.random.PRNGKey(0)
    kx, k1, k2, k3, k4, k5 = jax.random.split(key, 6)
    x = jax.random.normal(kx, (B, T, D), jnp.float32)
    params = dict(
        wq=jax.random.normal(k1, (D, D), jnp.float32) * 0.08,
        wk=jax.random.normal(k2, (D, D), jnp.float32) * 0.08,
        wv=jax.random.normal(k3, (D, D), jnp.float32) * 0.08,
        wo=jax.random.normal(k4, (D, D), jnp.float32) * 0.08,
        bo=jax.random.normal(k5, (D,), jnp.float32) * 0.08,
    )

    for causal in (False, True):
        out = multi_head_attention(x, params, num_heads=num_heads,
                                   use_causal_mask=causal)
        out = jax.block_until_ready(out)
        ref = mha_reference(x, params, num_heads, use_causal_mask=causal)
        assert out.shape == (B, T, D)
        assert bool(jnp.all(jnp.isfinite(out)))
        err = float(jnp.max(jnp.abs(out - ref)))
        assert bool(jnp.allclose(out, ref, rtol=2e-2, atol=2e-2)), (
            f"causal={causal}: max abs err = {err}")

    print("KERNEL_OK")
</pallas_src>

<mosaic_0001>
module attributes {stable_mosaic.version = 11 : i64} {
  func.func @_mha_kernel(%arg0: i32, %arg1: memref<1x8x32xf32, #tpu.memory_space<vmem>>, %arg2: memref<2x32x16xf32, #tpu.memory_space<vmem>>, %arg3: memref<2x32x16xf32, #tpu.memory_space<vmem>>, %arg4: memref<2x32x16xf32, #tpu.memory_space<vmem>>, %arg5: memref<2x16x32xf32, #tpu.memory_space<vmem>>, %arg6: memref<1x32xf32, #tpu.memory_space<vmem>>, %arg7: memref<1x8x32xf32, #tpu.memory_space<vmem>>) attributes {dimension_semantics = [#tpu.dimension_semantics<parallel>], iteration_bounds = array<i64: 2>, scalar_prefetch = 0 : i64, scratch_operands = 0 : i64, tpu.core_type = #tpu.core_type<tc>, window_params = [{transform_indices = @transform_0, window_bounds = array<i64: 1, 8, 32>}, {pipeline_mode = #tpu.pipeline_mode<synchronous>, transform_indices = @transform_1, window_bounds = array<i64: 2, 32, 16>}, {pipeline_mode = #tpu.pipeline_mode<synchronous>, transform_indices = @transform_2, window_bounds = array<i64: 2, 32, 16>}, {pipeline_mode = #tpu.pipeline_mode<synchronous>, transform_indices = @transform_3, window_bounds = array<i64: 2, 32, 16>}, {pipeline_mode = #tpu.pipeline_mode<synchronous>, transform_indices = @transform_4, window_bounds = array<i64: 2, 16, 32>}, {pipeline_mode = #tpu.pipeline_mode<synchronous>, transform_indices = @transform_5, window_bounds = array<i64: 1, 32>}, {transform_indices = @transform_6, window_bounds = array<i64: 1, 8, 32>}]} {
    %c0 = arith.constant 0 : index
    %c0_0 = arith.constant 0 : index
    %c0_1 = arith.constant 0 : index
    %0 = vector.load %arg1[%c0, %c0_0, %c0_1] : memref<1x8x32xf32, #tpu.memory_space<vmem>>, vector<1x8x32xf32>
    %1 = vector.shape_cast %0 : vector<1x8x32xf32> to vector<8x32xf32>
    %2 = vector.shape_cast %1 : vector<8x32xf32> to vector<1x8x32xf32>
    %3 = vector.shape_cast %2 : vector<1x8x32xf32> to vector<1x8x32xf32>
    %4 = vector.broadcast %3 : vector<1x8x32xf32> to vector<2x8x32xf32>
    %c0_2 = arith.constant 0 : index
    %c0_3 = arith.constant 0 : index
    %c0_4 = arith.constant 0 : index
    %5 = vector.load %arg2[%c0_2, %c0_3, %c0_4] : memref<2x32x16xf32, #tpu.memory_space<vmem>>, vector<2x32x16xf32>
    "tpu.trace_start"() <{level = 10 : i32, message = "htd,hdk->htk"}> : () -> ()
    %cst = arith.constant dense<0.000000e+00> : vector<2x8x16xf32>
    %6 = tpu.matmul %4, %5, %cst {dimension_numbers = #tpu.dot_dimension_numbers<[2], [1], [1], [2], [0, 0, 0, 1, 1, 2], [0], [0]>} : vector<2x8x32xf32>, vector<2x32x16xf32>, vector<2x8x16xf32> -> vector<2x8x16xf32>
    "tpu.trace_stop"() : () -> ()
    %c0_5 = arith.constant 0 : index
    %c0_6 = arith.constant 0 : index
    %c0_7 = arith.constant 0 : index
    %7 = vector.load %arg3[%c0_5, %c0_6, %c0_7] : memref<2x32x16xf32, #tpu.memory_space<vmem>>, vector<2x32x16xf32>
    "tpu.trace_start"() <{level = 10 : i32, message = "htd,hdk->htk"}> : () -> ()
    %cst_8 = arith.constant dense<0.000000e+00> : vector<2x8x16xf32>
    %8 = tpu.matmul %4, %7, %cst_8 {dimension_numbers = #tpu.dot_dimension_numbers<[2], [1], [1], [2], [0, 0, 0, 1, 1, 2], [0], [0]>} : vector<2x8x32xf32>, vector<2x32x16xf32>, vector<2x8x16xf32> -> vector<2x8x16xf32>
    "tpu.trace_stop"() : () -> ()
    %c0_9 = arith.constant 0 : index
    %c0_10 = arith.constant 0 : index
    %c0_11 = arith.constant 0 : index
    %9 = vector.load %arg4[%c0_9, %c0_10, %c0_11] : memref<2x32x16xf32, #tpu.memory_space<vmem>>, vector<2x32x16xf32>
    "tpu.trace_start"() <{level = 10 : i32, message = "htd,hdk->htk"}> : () -> ()
    %cst_12 = arith.constant dense<0.000000e+00> : vector<2x8x16xf32>
    %10 = tpu.matmul %4, %9, %cst_12 {dimension_numbers = #tpu.dot_dimension_numbers<[2], [1], [1], [2], [0, 0, 0, 1, 1, 2], [0], [0]>} : vector<2x8x32xf32>, vector<2x32x16xf32>, vector<2x8x16xf32> -> vector<2x8x16xf32>
    "tpu.trace_stop"() : () -> ()
    "tpu.trace_start"() <{level = 10 : i32, message = "hqd,hkd->hqk"}> : () -> ()
    %cst_13 = arith.constant dense<0.000000e+00> : vector<2x8x8xf32>
    %11 = tpu.matmul %6, %8, %cst_13 {dimension_numbers = #tpu.dot_dimension_numbers<[2], [2], [1], [1], [0, 0, 0, 1, 1, 1], [0], [0]>} : vector<2x8x16xf32>, vector<2x8x16xf32>, vector<2x8x8xf32> -> vector<2x8x8xf32>
    "tpu.trace_stop"() : () -> ()
    %cst_14 = arith.constant dense<0xFF800000> : vector<2x8xf32>
    %12 = vector.multi_reduction <maximumf>, %11, %cst_14 [2] : vector<2x8x8xf32> to vector<2x8xf32>
    %13 = vector.shape_cast %12 : vector<2x8xf32> to vector<2x8x1xf32>
    %14 = vector.broadcast %13 : vector<2x8x1xf32> to vector<2x8x8xf32>
    %15 = arith.subf %11, %14 : vector<2x8x8xf32>
    %16 = math.exp %15 : vector<2x8x8xf32>
    %cst_15 = arith.constant dense<0.000000e+00> : vector<2x8xf32>
    %17 = vector.multi_reduction <add>, %16, %cst_15 [2] : vector<2x8x8xf32> to vector<2x8xf32>
    %18 = vector.shape_cast %17 : vector<2x8xf32> to vector<2x8x1xf32>
    %19 = tpu.reciprocal %18 {approx = true} : vector<2x8x1xf32> -> vector<2x8x1xf32>
    %20 = vector.broadcast %19 : vector<2x8x1xf32> to vector<2x8x8xf32>
    %21 = arith.mulf %16, %20 : vector<2x8x8xf32>
    "tpu.trace_start"() <{level = 10 : i32, message = "hqk,hkd->hqd"}> : () -> ()
    %cst_16 = arith.constant dense<0.000000e+00> : vector<2x8x16xf32>
    %22 = tpu.matmul %21, %10, %cst_16 {dimension_numbers = #tpu.dot_dimension_numbers<[2], [1], [1], [2], [0, 0, 0, 1, 1, 2], [0], [0]>} : vector<2x8x8xf32>, vector<2x8x16xf32>, vector<2x8x16xf32> -> vector<2x8x16xf32>
    "tpu.trace_stop"() : () -> ()
    %c0_17 = arith.constant 0 : index
    %c0_18 = arith.constant 0 : index
    %c0_19 = arith.constant 0 : index
    %23 = vector.load %arg5[%c0_17, %c0_18, %c0_19] : memref<2x16x32xf32, #tpu.memory_space<vmem>>, vector<2x16x32xf32>
    "tpu.trace_start"() <{level = 10 : i32, message = "hqd,hdo->hqo"}> : () -> ()
    %cst_20 = arith.constant dense<0.000000e+00> : vector<2x8x32xf32>
    %24 = tpu.matmul %22, %23, %cst_20 {dimension_numbers = #tpu.dot_dimension_numbers<[2], [1], [1], [2], [0, 0, 0, 1, 1, 2], [0], [0]>} : vector<2x8x16xf32>, vector<2x16x32xf32>, vector<2x8x32xf32> -> vector<2x8x32xf32>
    "tpu.trace_stop"() : () -> ()
    %cst_21 = arith.constant dense<0.000000e+00> : vector<8x32xf32>
    %25 = vector.multi_reduction <add>, %24, %cst_21 [0] : vector<2x8x32xf32> to vector<8x32xf32>
    %c0_22 = arith.constant 0 : index
    %c0_23 = arith.constant 0 : index
    %26 = vector.load %arg6[%c0_22, %c0_23] : memref<1x32xf32, #tpu.memory_space<vmem>>, vector<1x32xf32>
    %27 = vector.broadcast %26 : vector<1x32xf32> to vector<8x32xf32>
    %28 = arith.addf %25, %27 : vector<8x32xf32>
    %c0_24 = arith.constant 0 : index
    %c0_25 = arith.constant 0 : index
    %c0_26 = arith.constant 0 : index
    %29 = vector.load %arg7[%c0_24, %c0_25, %c0_26] : memref<1x8x32xf32, #tpu.memory_space<vmem>>, vector<1x8x32xf32>
    %30 = vector.shape_cast %29 : vector<1x8x32xf32> to vector<8x32xf32>
    %31 = vector.shape_cast %28 : vector<8x32xf32> to vector<1x8x32xf32>
    tpu.vector_store %arg7[%c0_24, %c0_25, %c0_26], %31 {strides = array<i32>} : memref<1x8x32xf32, #tpu.memory_space<vmem>>, vector<1x8x32xf32>,
    return
  }
  func.func @transform_0(%arg0: i32) -> (i32, i32, i32) {
    %c0_i32 = arith.constant 0 : i32
    %c0_i32_0 = arith.constant 0 : i32
    %c0_i32_1 = arith.constant 0 : i32
    return %arg0, %c0_i32, %c0_i32_0 : i32, i32, i32
  }
  func.func @transform_1(%arg0: i32) -> (i32, i32, i32) {
    %c0_i32 = arith.constant 0 : i32
    %c0_i32_0 = arith.constant 0 : i32
    %c0_i32_1 = arith.constant 0 : i32
    %c0_i32_2 = arith.constant 0 : i32
    return %c0_i32, %c0_i32_0, %c0_i32_1 : i32, i32, i32
  }
  func.func @transform_2(%arg0: i32) -> (i32, i32, i32) {
    %c0_i32 = arith.constant 0 : i32
    %c0_i32_0 = arith.constant 0 : i32
    %c0_i32_1 = arith.constant 0 : i32
    %c0_i32_2 = arith.constant 0 : i32
    return %c0_i32, %c0_i32_0, %c0_i32_1 : i32, i32, i32
  }
  func.func @transform_3(%arg0: i32) -> (i32, i32, i32) {
    %c0_i32 = arith.constant 0 : i32
    %c0_i32_0 = arith.constant 0 : i32
    %c0_i32_1 = arith.constant 0 : i32
    %c0_i32_2 = arith.constant 0 : i32
    return %c0_i32, %c0_i32_0, %c0_i32_1 : i32, i32, i32
  }
  func.func @transform_4(%arg0: i32) -> (i32, i32, i32) {
    %c0_i32 = arith.constant 0 : i32
    %c0_i32_0 = arith.constant 0 : i32
    %c0_i32_1 = arith.constant 0 : i32
    %c0_i32_2 = arith.constant 0 : i32
    return %c0_i32, %c0_i32_0, %c0_i32_1 : i32, i32, i32
  }
  func.func @transform_5(%arg0: i32) -> (i32, i32) {
    %c0_i32 = arith.constant 0 : i32
    %c0_i32_0 = arith.constant 0 : i32
    %c0_i32_1 = arith.constant 0 : i32
    return %c0_i32, %c0_i32_0 : i32, i32
  }
  func.func @transform_6(%arg0: i32) -> (i32, i32, i32) {
    %c0_i32 = arith.constant 0 : i32
    %c0_i32_0 = arith.constant 0 : i32
    %c0_i32_1 = arith.constant 0 : i32
    return %arg0, %c0_i32, %c0_i32_0 : i32, i32, i32
  }
}

</mosaic_0001>

<llo_original>
// kernel: tpu_custom_call.1
$region0: #{tpu_custom_call.1}
  #allocation0 [shape = 'u32[]', space=smem, size = 0x4, offset = 0x4, fixed_abs, tag = 'smem constant byte address 0x4 - core index']
  #allocation1 [shape = 'u32[144,128]{1,0:T(1,128)}', space=vmem, size = 0x12000, scoped, tag = 'internal scratch']
  %s0 = inlined_call_operand.vmem [shape: f32[2,8,32], index: 0, kind: input, shape index: {}]
  %s1 = inlined_call_operand.vmem [shape: f32[2,32,16], index: 1, kind: input, shape index: {}]
  %s2 = inlined_call_operand.vmem [shape: f32[2,32,16], index: 2, kind: input, shape index: {}]
  %s3 = inlined_call_operand.vmem [shape: f32[2,32,16], index: 3, kind: input, shape index: {}]
  %s4 = inlined_call_operand.vmem [shape: f32[2,16,32], index: 4, kind: input, shape index: {}]
  %s5 = inlined_call_operand.vmem [shape: f32[1,32], index: 5, kind: input, shape index: {}]
  %s6 = inlined_call_operand.hbm [shape: f32[2,8,32], index: 6, kind: output, shape index: {}]
  %s7 = sld [smem:[#allocation0]]
  $region57: #{tpu_custom_call.1} parent=0
    _
  %s9 = ssub.s32 1, %s7
  %s10 = scalar_select 0, %s9, %s7
  $region1: #{tpu_custom_call.1} parent=0
    #allocation2 [shape = 'u8[8192]{0}', space=vmem, size = 0x2000, scoped, tag = 'output window, operand 0']
    #allocation3 [shape = 's32[2]{0}', space=sflag, size = 0x8, scoped, tag = 'scoped memory for tpu_custom_call.1']
    %11 = vsyncpa [#allocation3], 0
    %s12 = scalar_lea.sflag [#allocation3], 1
    %13 = vsyncpa %s12, 0
    loop: start=0, step=1, limit=4
    $region2: #{tpu_custom_call.1} parent=1 // loop_pre_header
      _
    $region3: #{tpu_custom_call.1} parent=1 // loop_header
      %s15 = sphi 0, %s19
      %p16 = scmp.ge.s32.totalorder %s15, 4
      %s25 = sphi 0, %s27
      %s28 = sphi 0, %s25
      %s29 = sphi 0, %s28
      %s45 = sphi 0, %s29
      %s49 = sphi 0, %s49
      %s51 = sphi 0, %s49
      %s52 = sphi 0, %s51
      %s66 = sphi 0, %s52
      %s70 = sphi 0, %s70
      %s72 = sphi 0, %s70
      %s73 = sphi 0, %s72
      %s87 = sphi 0, %s73
      %s91 = sphi 0, %s91
      %s93 = sphi 0, %s91
      %s94 = sphi 0, %s93
      %s108 = sphi 0, %s94
      %s112 = sphi 0, %s112
      %s114 = sphi 0, %s112
      %s115 = sphi 0, %s114
      %s129 = sphi 0, %s115
      %s133 = sphi 0, %s133
      %s135 = sphi 0, %s133
      %s136 = sphi 0, %s135
      %s150 = sphi 0, %s136
      %s156 = sphi 0, %s158
      %s159 = sphi 0, %s156
      %s160 = sphi 0, %s159
      %s176 = sphi 0, %s160
    $region4: #{tpu_custom_call.1} parent=1 // loop_header_branch
      %18 = sbr.rel (%p16) target = $region8
    $region5: #{tpu_custom_call.1} parent=1 // loop_body
      %s20 = ssub.s32 %s15, 1
      %s21 = ssub.s32 %s15, 2
      %s22 = sadd.s32 %s15, 1
      %s23 = ssub.s32 %s15, %s22
      %p24 = scmp.eq.s32.totalorder %s23, 0
      %s26 = sadd.s32 %s25, 1
      %s27 = scalar_select %p24, %s25, %s26
      %p30 = pneg %p24
      %p31 = scmp.eq.s32.totalorder %s15, 1
      %p32 = por %p30, %p31
      %p33 = scmp.ne.s32.totalorder %s25, %s28
      %p34 = scmp.eq.s32.totalorder %s15, 0
      %p35 = por %p33, %p34
      %p36 = scmp.ne.s32.totalorder %s25, %s28
      %p37 = scmp.eq.s32.totalorder %s20, 1
      %p38 = por %p36, %p37
      %p39 = scmp.ne.s32.totalorder %s28, %s29
      %p40 = scmp.eq.s32.totalorder %s20, 0
      %p41 = por %p39, %p40
      %p42 = scmp.ne.s32.totalorder %s28, %s29
      %p43 = scmp.eq.s32.totalorder %s21, 1
      %p44 = por %p42, %p43
      %p46 = scmp.ne.s32.totalorder %s29, %s45
      %p47 = scmp.eq.s32.totalorder %s21, 0
      %p48 = por %p46, %p47
      %s50 = sadd.s32 %s49, 1
      %p53 = scmp.eq.s32.totalorder %s15, 1
      %p54 = scmp.ne.s32.totalorder %s49, %s51
      %p55 = scmp.eq.s32.totalorder %s15, 0
      %p56 = por %p54, %p55
      %p57 = scmp.ne.s32.totalorder %s49, %s51
      %p58 = scmp.eq.s32.totalorder %s20, 1
      %p59 = por %p57, %p58
      %p60 = scmp.ne.s32.totalorder %s51, %s52
      %p61 = scmp.eq.s32.totalorder %s20, 0
      %p62 = por %p60, %p61
      %p63 = scmp.ne.s32.totalorder %s51, %s52
      %p64 = scmp.eq.s32.totalorder %s21, 1
      %p65 = por %p63, %p64
      %p67 = scmp.ne.s32.totalorder %s52, %s66
      %p68 = scmp.eq.s32.totalorder %s21, 0
      %p69 = por %p67, %p68
      %s71 = sadd.s32 %s70, 1
      %p74 = scmp.eq.s32.totalorder %s15, 1
      %p75 = scmp.ne.s32.totalorder %s70, %s72
      %p76 = scmp.eq.s32.totalorder %s15, 0
      %p77 = por %p75, %p76
      %p78 = scmp.ne.s32.totalorder %s70, %s72
      %p79 = scmp.eq.s32.totalorder %s20, 1
      %p80 = por %p78, %p79
      %p81 = scmp.ne.s32.totalorder %s72, %s73
      %p82 = scmp.eq.s32.totalorder %s20, 0
      %p83 = por %p81, %p82
      %p84 = scmp.ne.s32.totalorder %s72, %s73
      %p85 = scmp.eq.s32.totalorder %s21, 1
      %p86 = por %p84, %p85
      %p88 = scmp.ne.s32.totalorder %s73, %s87
      %p89 = scmp.eq.s32.totalorder %s21, 0
      %p90 = por %p88, %p89
      %s92 = sadd.s32 %s91, 1
      %p95 = scmp.eq.s32.totalorder %s15, 1
      %p96 = scmp.ne.s32.totalorder %s91, %s93
      %p97 = scmp.eq.s32.totalorder %s15, 0
      %p98 = por %p96, %p97
      %p99 = scmp.ne.s32.totalorder %s91, %s93
      %p100 = scmp.eq.s32.totalorder %s20, 1
      %p101 = por %p99, %p100
      %p102 = scmp.ne.s32.totalorder %s93, %s94
      %p103 = scmp.eq.s32.totalorder %s20, 0
      %p104 = por %p102, %p103
      %p105 = scmp.ne.s32.totalorder %s93, %s94
      %p106 = scmp.eq.s32.totalorder %s21, 1
      %p107 = por %p105, %p106
      %p109 = scmp.ne.s32.totalorder %s94, %s108
      %p110 = scmp.eq.s32.totalorder %s21, 0
      %p111 = por %p109, %p110
      %s113 = sadd.s32 %s112, 1
      %p116 = scmp.eq.s32.totalorder %s15, 1
      %p117 = scmp.ne.s32.totalorder %s112, %s114
      %p118 = scmp.eq.s32.totalorder %s15, 0
      %p119 = por %p117, %p118
      %p120 = scmp.ne.s32.totalorder %s112, %s114
      %p121 = scmp.eq.s32.totalorder %s20, 1
      %p122 = por %p120, %p121
      %p123 = scmp.ne.s32.totalorder %s114, %s115
      %p124 = scmp.eq.s32.totalorder %s20, 0
      %p125 = por %p123, %p124
      %p126 = scmp.ne.s32.totalorder %s114, %s115
      %p127 = scmp.eq.s32.totalorder %s21, 1
      %p128 = por %p126, %p127
      %p130 = scmp.ne.s32.totalorder %s115, %s129
      %p131 = scmp.eq.s32.totalorder %s21, 0
      %p132 = por %p130, %p131
      %s134 = sadd.s32 %s133, 1
      %p137 = scmp.eq.s32.totalorder %s15, 1
      %p138 = scmp.ne.s32.totalorder %s133, %s135
      %p139 = scmp.eq.s32.totalorder %s15, 0
      %p140 = por %p138, %p139
      %p141 = scmp.ne.s32.totalorder %s133, %s135
      %p142 = scmp.eq.s32.totalorder %s20, 1
      %p143 = por %p141, %p142
      %p144 = scmp.ne.s32.totalorder %s135, %s136
      %p145 = scmp.eq.s32.totalorder %s20, 0
      %p146 = por %p144, %p145
      %p147 = scmp.ne.s32.totalorder %s135, %s136
      %p148 = scmp.eq.s32.totalorder %s21, 1
      %p149 = por %p147, %p148
      %p151 = scmp.ne.s32.totalorder %s136, %s150
      %p152 = scmp.eq.s32.totalorder %s21, 0
      %p153 = por %p151, %p152
      %s154 = ssub.s32 %s15, %s22
      %p155 = scmp.eq.s32.totalorder %s154, 0
      %s157 = sadd.s32 %s156, 1
      %s158 = scalar_select %p155, %s156, %s157
      %p161 = pneg %p155
      %p162 = scmp.eq.s32.totalorder %s15, 1
      %p163 = por %p161, %p162
      %p164 = scmp.ne.s32.totalorder %s156, %s159
      %p165 = scmp.eq.s32.totalorder %s15, 0
      %p166 = por %p164, %p165
      %p167 = scmp.ne.s32.totalorder %s156, %s159
      %p168 = scmp.eq.s32.totalorder %s20, 1
      %p169 = por %p167, %p168
      %p170 = scmp.ne.s32.totalorder %s159, %s160
      %p171 = scmp.eq.s32.totalorder %s20, 0
      %p172 = por %p170, %p171
      %p173 = scmp.ne.s32.totalorder %s159, %s160
      %p174 = scmp.eq.s32.totalorder %s21, 1
      %p175 = por %p173, %p174
      %p177 = scmp.ne.s32.totalorder %s160, %s176
      %p178 = scmp.eq.s32.totalorder %s21, 0
      %p179 = por %p177, %p178
      %p180 = scmp.le.s32.totalorder 1, %s15
      %p181 = scmp.lt.s32.totalorder %s15, 3
      %p182 = pnand %p180, %p181
      %p183 = pneg %p182
      // Predicated region
      $region9: #{tpu_custom_call.1} parent=5 // pred_check
        _
      $region10: #{tpu_custom_call.1} parent=5 // pred_check_branch
        %185 = sbr.rel (%p182) target = $region12
      $region11: #{tpu_custom_call.1} parent=5 // pred_region
        %s186 = ssub.s32 %s15, 1
        // Predicated region
        $region13: #{tpu_custom_call.1} parent=11 // pred_check
          %p187 = pneg %p62
        $region14: #{tpu_custom_call.1} parent=11 // pred_check_branch
          %189 = sbr.rel (%p187) target = $region16
        $region15: #{tpu_custom_call.1} parent=11 // pred_region
          _
        $region16: #{tpu_custom_call.1} parent=11 // pred_fallthru
          _
        // Predicated region
        $region17: #{tpu_custom_call.1} parent=11 // pred_check
          %p190 = pneg %p83
        $region18: #{tpu_custom_call.1} parent=11 // pred_check_branch
          %192 = sbr.rel (%p190) target = $region20
        $region19: #{tpu_custom_call.1} parent=11 // pred_region
          _
        $region20: #{tpu_custom_call.1} parent=11 // pred_fallthru
          _
        // Predicated region
        $region21: #{tpu_custom_call.1} parent=11 // pred_check
          %p193 = pneg %p104
        $region22: #{tpu_custom_call.1} parent=11 // pred_check_branch
          %195 = sbr.rel (%p193) target = $region24
        $region23: #{tpu_custom_call.1} parent=11 // pred_region
          _
        $region24: #{tpu_custom_call.1} parent=11 // pred_fallthru
          _
        // Predicated region
        $region25: #{tpu_custom_call.1} parent=11 // pred_check
          %p196 = pneg %p125
        $region26: #{tpu_custom_call.1} parent=11 // pred_check_branch
          %198 = sbr.rel (%p196) target = $region28
        $region27: #{tpu_custom_call.1} parent=11 // pred_region
          _
        $region28: #{tpu_custom_call.1} parent=11 // pred_fallthru
          _
        // Predicated region
        $region29: #{tpu_custom_call.1} parent=11 // pred_check
          %p199 = pneg %p146
        $region30: #{tpu_custom_call.1} parent=11 // pred_check_branch
          %201 = sbr.rel (%p199) target = $region32
        $region31: #{tpu_custom_call.1} parent=11 // pred_region
          _
        $region32: #{tpu_custom_call.1} parent=11 // pred_fallthru
          _
      $region12: #{tpu_custom_call.1} parent=5 // pred_fallthru
        _
      %p202 = scmp.lt.s32.totalorder %s15, 2
      // Predicated region
      $region33: #{tpu_custom_call.1} parent=5 // pred_check
        %p203 = pneg %p202
      $region34: #{tpu_custom_call.1} parent=5 // pred_check_branch
        %205 = sbr.rel (%p203) target = $region36
      $region35: #{tpu_custom_call.1} parent=5 // pred_region
        // Predicated region
        $region37: #{tpu_custom_call.1} parent=35 // pred_check
          %p206 = pneg %p35
        $region38: #{tpu_custom_call.1} parent=35 // pred_check_branch
          %208 = sbr.rel (%p206) target = $region40
        $region39: #{tpu_custom_call.1} parent=35 // pred_region
          %p209 = scmp.lt.s32.totalorder %s15, 1
          %s210 = scalar_select %p209, %s15, 1
          %s211 = smul.addr %s210, 8
          %s212 = scalar_lea.vmem %s0, %s211
        $region40: #{tpu_custom_call.1} parent=35 // pred_fallthru
          _
      $region36: #{tpu_custom_call.1} parent=5 // pred_fallthru
        _
      %p213 = scmp.le.s32.totalorder 1, %s15
      %p214 = scmp.lt.s32.totalorder %s15, 3
      %p215 = pnand %p213, %p214
      %p216 = pneg %p215
      // Predicated region
      $region41: #{tpu_custom_call.1} parent=5 // pred_check
        _
      $region42: #{tpu_custom_call.1} parent=5 // pred_check_branch
        %218 = sbr.rel (%p215) target = $region44
      $region43: #{tpu_custom_call.1} parent=5 // pred_region
        %s219 = ssub.s32 %s15, 1
        %p220 = scmp.lt.s32.totalorder %s20, 1
        %s221 = scalar_select %p220, %s20, 1
        %s222 = smul.addr %s221, 8
        %s223 = scalar_lea.vmem %s0, %s222
        %p224 = pneg %p41
        %p225 = pneg %p38
        %p226 = pneg %p62
        %p227 = pneg %p59
        %p228 = pneg %p83
        %p229 = pneg %p80
        %p230 = pneg %p104
        %p231 = pneg %p101
        %p232 = pneg %p125
        %p233 = pneg %p122
        %p234 = pneg %p146
        %p235 = pneg %p143
        %p236 = pneg %p172
        %p237 = pneg %p169
        %s238 = sand.u32 %s159, 1
        %s239 = scalar_lea.sflag [#allocation3], %s238
        %s240 = sand.u32 %s159, 1
        %s241 = smul.addr %s240, 8
        %s242 = scalar_lea.vmem [#allocation2], %s241
        %p243 = scmp.lt.s32.totalorder %s20, 1
        %s244 = scalar_select %p243, %s20, 1
        %s245 = smul.addr %s244, 8
        %s246 = scalar_lea.vmem %s0, %s245
        %v247 = vld [vmem:[%s246] sm:$0xff]
        %v248 = vld [vmem:[%s1] sm:$0xff]
        %v249 = vld [vmem:[%s1 + $0x8] sm:$0xff]
        %v250 = vld [vmem:[%s1 + $0x10] sm:$0xff]
        %v251 = vld [vmem:[%s1 + $0x18] sm:$0xff]
        %v252 = vld [vmem:[%s1 + $0x20] sm:$0xff]
        %v253 = vld [vmem:[%s1 + $0x28] sm:$0xff]
        %v254 = vld [vmem:[%s1 + $0x30] sm:$0xff]
        %v255 = vld [vmem:[%s1 + $0x38] sm:$0xff]
        %vm256 = vcmask 261120
        %v258 = vsel %vm256, %v247, 0
        %260 = vmatprep.subr.mxu0 0.0
        %261 = vmatpush1.msra.mxu0 %v248
        %262 = vmatprep.subr.mxu0 0.0
        %263 = vmatpush1.msra.mxu0 %v249
        %264 = vmatprep.subr.mxu0 0.0
        %265 = vmatpush1.msra.mxu0 %v250
        %266 = vmatprep.subr.mxu0 0.0
        %267 = vmatpush1.msra.mxu0 %v251
        %268 = vmatprep.subr.mxu0 0.0
        %269 = vmatpush1.msra.mxu0 0.0
        %270 = vmatprep.subr.mxu0 0.0
        %271 = vmatpush1.msra.mxu0 0.0
        %272 = vmatprep.subr.mxu0 0.0
        %273 = vmatpush1.msra.mxu0 0.0
        %274 = vmatprep.subr.mxu0 0.0
        %275 = vmatpush1.msra.mxu0 0.0
        %276 = vmatprep.subr.mxu0 0.0
        %277 = vmatpush1.msra.mxu0 0.0
        %278 = vmatprep.subr.mxu0 0.0
        %279 = vmatpush1.msra.mxu0 0.0
        %280 = vmatprep.subr.mxu0 0.0
        %281 = vmatpush1.msra.mxu0 0.0
        %282 = vmatprep.subr.mxu0 0.0
        %283 = vmatpush1.msra.mxu0 0.0
        %284 = vmatprep.subr.mxu0 0.0
        %285 = vmatpush1.msra.mxu0 0.0
        %286 = vmatprep.subr.mxu0 0.0
        %287 = vmatpush1.msra.mxu0 0.0
        %288 = vmatprep.subr.mxu0 0.0
        %289 = vmatpush1.msra.mxu0 0.0
        %290 = vmatprep.subr.mxu0 0.0
        %291 = vmatpush1.msra.mxu0 0.0
        %292 = vmatprep.subr.mxu0 0.0
        %293 = vmatpush1.msra.mxu0 0.0
        %294 = vmatprep.subr.mxu0 0.0
        %295 = vmatpush1.msra.mxu0 0.0
        %296 = vmatprep.subr.mxu0 0.0
        %297 = vmatpush1.msra.mxu0 0.0
        %298 = vmatprep.subr.mxu0 0.0
        %299 = vmatpush1.msra.mxu0 0.0
        %300 = vmatprep.subr.mxu0 0.0
        %301 = vmatpush1.msra.mxu0 0.0
        %302 = vmatprep.subr.mxu0 0.0
        %303 = vmatpush1.msra.mxu0 0.0
        %304 = vmatprep.subr.mxu0 0.0
        %305 = vmatpush1.msra.mxu0 0.0
        %306 = vmatprep.subr.mxu0 0.0
        %307 = vmatpush1.msra.mxu0 0.0
        %308 = vmatprep.subr.mxu0 0.0
        %309 = vmatpush1.msra.mxu0 0.0
        %310 = vmatprep.subr.mxu0 0.0
        %311 = vmatpush1.msra.mxu0 0.0
        %312 = vmatprep.subr.mxu0 0.0
        %313 = vmatpush1.msra.mxu0 0.0
        %314 = vmatprep.subr.mxu0 0.0
        %315 = vmatpush1.msra.mxu0 0.0
        %316 = vmatprep.subr.mxu0 0.0
        %317 = vmatpush1.msra.mxu0 0.0
        %318 = vmatprep.subr.mxu0 0.0
        %319 = vmatpush1.msra.mxu0 0.0
        %320 = vmatprep.subr.mxu0 0.0
        %321 = vmatpush1.msra.mxu0 0.0
        %322 = vmatprep.subr.mxu0 0.0
        %323 = vmatpush1.msra.mxu0 0.0
        %324 = vmatprep.mubr.f32.mxu0 0.0
        %325 = vmatmul.mubr.f32.gmra.mrb[0].mxu0 %v258
        %v326 = vpop.f32.mrb[0].mxu0
        %v327 = vadd.f32 0.0, %v326
        %v328 = vpop.f32.mrb[0].mxu0
        %329 = vdwg.mxu0
        %330 = vmatprep.subr.mxu0 0.0
        %331 = vmatpush1.msra.mxu0 %v252
        %332 = vmatprep.subr.mxu0 0.0
        %333 = vmatpush1.msra.mxu0 %v253
        %334 = vmatprep.subr.mxu0 0.0
        %335 = vmatpush1.msra.mxu0 %v254
        %336 = vmatprep.subr.mxu0 0.0
        %337 = vmatpush1.msra.mxu0 %v255
        %338 = vmatprep.subr.mxu0 0.0
        %339 = vmatpush1.msra.mxu0 0.0
        %340 = vmatprep.subr.mxu0 0.0
        %341 = vmatpush1.msra.mxu0 0.0
        %342 = vmatprep.subr.mxu0 0.0
        %343 = vmatpush1.msra.mxu0 0.0
        %344 = vmatprep.subr.mxu0 0.0
        %345 = vmatpush1.msra.mxu0 0.0
        %346 = vmatprep.subr.mxu0 0.0
        %347 = vmatpush1.msra.mxu0 0.0
        %348 = vmatprep.subr.mxu0 0.0
        %349 = vmatpush1.msra.mxu0 0.0
        %350 = vmatprep.subr.mxu0 0.0
        %351 = vmatpush1.msra.mxu0 0.0
        %352 = vmatprep.subr.mxu0 0.0
        %353 = vmatpush1.msra.mxu0 0.0
        %354 = vmatprep.subr.mxu0 0.0
        %355 = vmatpush1.msra.mxu0 0.0
        %356 = vmatprep.subr.mxu0 0.0
        %357 = vmatpush1.msra.mxu0 0.0
        %358 = vmatprep.subr.mxu0 0.0
        %359 = vmatpush1.msra.mxu0 0.0
        %360 = vmatprep.subr.mxu0 0.0
        %361 = vmatpush1.msra.mxu0 0.0
        %362 = vmatprep.subr.mxu0 0.0
        %363 = vmatpush1.msra.mxu0 0.0
        %364 = vmatprep.subr.mxu0 0.0
        %365 = vmatpush1.msra.mxu0 0.0
        %366 = vmatprep.subr.mxu0 0.0
        %367 = vmatpush1.msra.mxu0 0.0
        %368 = vmatprep.subr.mxu0 0.0
        %369 = vmatpush1.msra.mxu0 0.0
        %370 = vmatprep.subr.mxu0 0.0
        %371 = vmatpush1.msra.mxu0 0.0
        %372 = vmatprep.subr.mxu0 0.0
        %373 = vmatpush1.msra.mxu0 0.0
        %374 = vmatprep.subr.mxu0 0.0
        %375 = vmatpush1.msra.mxu0 0.0
        %376 = vmatprep.subr.mxu0 0.0
        %377 = vmatpush1.msra.mxu0 0.0
        %378 = vmatprep.subr.mxu0 0.0
        %379 = vmatpush1.msra.mxu0 0.0
        %380 = vmatprep.subr.mxu0 0.0
        %381 = vmatpush1.msra.mxu0 0.0
        %382 = vmatprep.subr.mxu0 0.0
        %383 = vmatpush1.msra.mxu0 0.0
        %384 = vmatprep.subr.mxu0 0.0
        %385 = vmatpush1.msra.mxu0 0.0
        %386 = vmatprep.subr.mxu0 0.0
        %387 = vmatpush1.msra.mxu0 0.0
        %388 = vmatprep.subr.mxu0 0.0
        %389 = vmatpush1.msra.mxu0 0.0
        %390 = vmatprep.subr.mxu0 0.0
        %391 = vmatpush1.msra.mxu0 0.0
        %392 = vmatprep.subr.mxu0 0.0
        %393 = vmatpush1.msra.mxu0 0.0
        %394 = vmatprep.mubr.f32.mxu0 0.0
        %395 = vmatmul.mubr.f32.gmra.mrb[0].mxu0 %v258
        %v396 = vpop.f32.mrb[0].mxu0
        %v397 = vadd.f32 0.0, %v396
        %v398 = vpop.f32.mrb[0].mxu0
        %399 = vdwg.mxu0
        %v400 = vld [vmem:[%s2] sm:$0xff]
        %v401 = vld [vmem:[%s2 + $0x8] sm:$0xff]
        %v402 = vld [vmem:[%s2 + $0x10] sm:$0xff]
        %v403 = vld [vmem:[%s2 + $0x18] sm:$0xff]
        %v404 = vld [vmem:[%s2 + $0x20] sm:$0xff]
        %v405 = vld [vmem:[%s2 + $0x28] sm:$0xff]
        %v406 = vld [vmem:[%s2 + $0x30] sm:$0xff]
        %v407 = vld [vmem:[%s2 + $0x38] sm:$0xff]
        %408 = vmatprep.subr.mxu0 0.0
        %409 = vmatpush1.msra.mxu0 %v400
        %410 = vmatprep.subr.mxu0 0.0
        %411 = vmatpush1.msra.mxu0 %v401
        %412 = vmatprep.subr.mxu0 0.0
        %413 = vmatpush1.msra.mxu0 %v402
        %414 = vmatprep.subr.mxu0 0.0
        %415 = vmatpush1.msra.mxu0 %v403
        %416 = vmatprep.subr.mxu0 0.0
        %417 = vmatpush1.msra.mxu0 0.0
        %418 = vmatprep.subr.mxu0 0.0
        %419 = vmatpush1.msra.mxu0 0.0
        %420 = vmatprep.subr.mxu0 0.0
        %421 = vmatpush1.msra.mxu0 0.0
        %422 = vmatprep.subr.mxu0 0.0
        %423 = vmatpush1.msra.mxu0 0.0
        %424 = vmatprep.subr.mxu0 0.0
        %425 = vmatpush1.msra.mxu0 0.0
        %426 = vmatprep.subr.mxu0 0.0
        %427 = vmatpush1.msra.mxu0 0.0
        %428 = vmatprep.subr.mxu0 0.0
        %429 = vmatpush1.msra.mxu0 0.0
        %430 = vmatprep.subr.mxu0 0.0
        %431 = vmatpush1.msra.mxu0 0.0
        %432 = vmatprep.subr.mxu0 0.0
        %433 = vmatpush1.msra.mxu0 0.0
        %434 = vmatprep.subr.mxu0 0.0
        %435 = vmatpush1.msra.mxu0 0.0
        %436 = vmatprep.subr.mxu0 0.0
        %437 = vmatpush1.msra.mxu0 0.0
        %438 = vmatprep.subr.mxu0 0.0
        %439 = vmatpush1.msra.mxu0 0.0
        %440 = vmatprep.subr.mxu0 0.0
        %441 = vmatpush1.msra.mxu0 0.0
        %442 = vmatprep.subr.mxu0 0.0
        %443 = vmatpush1.msra.mxu0 0.0
        %444 = vmatprep.subr.mxu0 0.0
        %445 = vmatpush1.msra.mxu0 0.0
        %446 = vmatprep.subr.mxu0 0.0
        %447 = vmatpush1.msra.mxu0 0.0
        %448 = vmatprep.subr.mxu0 0.0
        %449 = vmatpush1.msra.mxu0 0.0
        %450 = vmatprep.subr.mxu0 0.0
        %451 = vmatpush1.msra.mxu0 0.0
        %452 = vmatprep.subr.mxu0 0.0
        %453 = vmatpush1.msra.mxu0 0.0
        %454 = vmatprep.subr.mxu0 0.0
        %455 = vmatpush1.msra.mxu0 0.0
        %456 = vmatprep.subr.mxu0 0.0
        %457 = vmatpush1.msra.mxu0 0.0
        %458 = vmatprep.subr.mxu0 0.0
        %459 = vmatpush1.msra.mxu0 0.0
        %460 = vmatprep.subr.mxu0 0.0
        %461 = vmatpush1.msra.mxu0 0.0
        %462 = vmatprep.subr.mxu0 0.0
        %463 = vmatpush1.msra.mxu0 0.0
        %464 = vmatprep.subr.mxu0 0.0
        %465 = vmatpush1.msra.mxu0 0.0
        %466 = vmatprep.subr.mxu0 0.0
        %467 = vmatpush1.msra.mxu0 0.0
        %468 = vmatprep.subr.mxu0 0.0
        %469 = vmatpush1.msra.mxu0 0.0
        %470 = vmatprep.subr.mxu0 0.0
        %471 = vmatpush1.msra.mxu0 0.0
        %472 = vmatprep.mubr.f32.mxu0 0.0
        %473 = vmatmul.mubr.f32.gmra.mrb[0].mxu0 %v258
        %v474 = vpop.f32.mrb[0].mxu0
        %v475 = vadd.f32 0.0, %v474
        %v476 = vpop.f32.mrb[0].mxu0
        %477 = vdwg.mxu0
        %478 = vmatprep.subr.mxu0 0.0
        %479 = vmatpush1.msra.mxu0 %v404
        %480 = vmatprep.subr.mxu0 0.0
        %481 = vmatpush1.msra.mxu0 %v405
        %482 = vmatprep.subr.mxu0 0.0
        %483 = vmatpush1.msra.mxu0 %v406
        %484 = vmatprep.subr.mxu0 0.0
        %485 = vmatpush1.msra.mxu0 %v407
        %486 = vmatprep.subr.mxu0 0.0
        %487 = vmatpush1.msra.mxu0 0.0
        %488 = vmatprep.subr.mxu0 0.0
        %489 = vmatpush1.msra.mxu0 0.0
        %490 = vmatprep.subr.mxu0 0.0
        %491 = vmatpush1.msra.mxu0 0.0
        %492 = vmatprep.subr.mxu0 0.0
        %493 = vmatpush1.msra.mxu0 0.0
        %494 = vmatprep.subr.mxu0 0.0
        %495 = vmatpush1.msra.mxu0 0.0
        %496 = vmatprep.subr.mxu0 0.0
        %497 = vmatpush1.msra.mxu0 0.0
        %498 = vmatprep.subr.mxu0 0.0
        %499 = vmatpush1.msra.mxu0 0.0
        %500 = vmatprep.subr.mxu0 0.0
        %501 = vmatpush1.msra.mxu0 0.0
        %502 = vmatprep.subr.mxu0 0.0
        %503 = vmatpush1.msra.mxu0 0.0
        %504 = vmatprep.subr.mxu0 0.0
        %505 = vmatpush1.msra.mxu0 0.0
        %506 = vmatprep.subr.mxu0 0.0
        %507 = vmatpush1.msra.mxu0 0.0
        %508 = vmatprep.subr.mxu0 0.0
        %509 = vmatpush1.msra.mxu0 0.0
        %510 = vmatprep.subr.mxu0 0.0
        %511 = vmatpush1.msra.mxu0 0.0
        %512 = vmatprep.subr.mxu0 0.0
        %513 = vmatpush1.msra.mxu0 0.0
        %514 = vmatprep.subr.mxu0 0.0
        %515 = vmatpush1.msra.mxu0 0.0
        %516 = vmatprep.subr.mxu0 0.0
        %517 = vmatpush1.msra.mxu0 0.0
        %518 = vmatprep.subr.mxu0 0.0
        %519 = vmatpush1.msra.mxu0 0.0
        %520 = vmatprep.subr.mxu0 0.0
        %521 = vmatpush1.msra.mxu0 0.0
        %522 = vmatprep.subr.mxu0 0.0
        %523 = vmatpush1.msra.mxu0 0.0
        %524 = vmatprep.subr.mxu0 0.0
        %525 = vmatpush1.msra.mxu0 0.0
        %526 = vmatprep.subr.mxu0 0.0
        %527 = vmatpush1.msra.mxu0 0.0
        %528 = vmatprep.subr.mxu0 0.0
        %529 = vmatpush1.msra.mxu0 0.0
        %530 = vmatprep.subr.mxu0 0.0
        %531 = vmatpush1.msra.mxu0 0.0
        %532 = vmatprep.subr.mxu0 0.0
        %533 = vmatpush1.msra.mxu0 0.0
        %534 = vmatprep.subr.mxu0 0.0
        %535 = vmatpush1.msra.mxu0 0.0
        %536 = vmatprep.subr.mxu0 0.0
        %537 = vmatpush1.msra.mxu0 0.0
        %538 = vmatprep.subr.mxu0 0.0
        %539 = vmatpush1.msra.mxu0 0.0
        %540 = vmatprep.subr.mxu0 0.0
        %541 = vmatpush1.msra.mxu0 0.0
        %542 = vmatprep.mubr.f32.mxu0 0.0
        %543 = vmatmul.mubr.f32.gmra.mrb[0].mxu0 %v258
        %v544 = vpop.f32.mrb[0].mxu0
        %v545 = vadd.f32 0.0, %v544
        %v546 = vpop.f32.mrb[0].mxu0
        %547 = vdwg.mxu0
        %v548 = vld [vmem:[%s3] sm:$0xff]
        %v549 = vld [vmem:[%s3 + $0x8] sm:$0xff]
        %v550 = vld [vmem:[%s3 + $0x10] sm:$0xff]
        %v551 = vld [vmem:[%s3 + $0x18] sm:$0xff]
        %v552 = vld [vmem:[%s3 + $0x20] sm:$0xff]
        %v553 = vld [vmem:[%s3 + $0x28] sm:$0xff]
        %v554 = vld [vmem:[%s3 + $0x30] sm:$0xff]
        %v555 = vld [vmem:[%s3 + $0x38] sm:$0xff]
        %556 = vmatprep.subr.mxu0 0.0
        %557 = vmatpush1.msra.mxu0 %v548
        %558 = vmatprep.subr.mxu0 0.0
        %559 = vmatpush1.msra.mxu0 %v549
        %560 = vmatprep.subr.mxu0 0.0
        %561 = vmatpush1.msra.mxu0 %v550
        %562 = vmatprep.subr.mxu0 0.0
        %563 = vmatpush1.msra.mxu0 %v551
        %564 = vmatprep.subr.mxu0 0.0
        %565 = vmatpush1.msra.mxu0 0.0
        %566 = vmatprep.subr.mxu0 0.0
        %567 = vmatpush1.msra.mxu0 0.0
        %568 = vmatprep.subr.mxu0 0.0
        %569 = vmatpush1.msra.mxu0 0.0
        %570 = vmatprep.subr.mxu0 0.0
        %571 = vmatpush1.msra.mxu0 0.0
        %572 = vmatprep.subr.mxu0 0.0
        %573 = vmatpush1.msra.mxu0 0.0
        %574 = vmatprep.subr.mxu0 0.0
        %575 = vmatpush1.msra.mxu0 0.0
        %576 = vmatprep.subr.mxu0 0.0
        %577 = vmatpush1.msra.mxu0 0.0
        %578 = vmatprep.subr.mxu0 0.0
        %579 = vmatpush1.msra.mxu0 0.0
        %580 = vmatprep.subr.mxu0 0.0
        %581 = vmatpush1.msra.mxu0 0.0
        %582 = vmatprep.subr.mxu0 0.0
        %583 = vmatpush1.msra.mxu0 0.0
        %584 = vmatprep.subr.mxu0 0.0
        %585 = vmatpush1.msra.mxu0 0.0
        %586 = vmatprep.subr.mxu0 0.0
        %587 = vmatpush1.msra.mxu0 0.0
        %588 = vmatprep.subr.mxu0 0.0
        %589 = vmatpush1.msra.mxu0 0.0
        %590 = vmatprep.subr.mxu0 0.0
        %591 = vmatpush1.msra.mxu0 0.0
        %592 = vmatprep.subr.mxu0 0.0
        %593 = vmatpush1.msra.mxu0 0.0
        %594 = vmatprep.subr.mxu0 0.0
        %595 = vmatpush1.msra.mxu0 0.0
        %596 = vmatprep.subr.mxu0 0.0
        %597 = vmatpush1.msra.mxu0 0.0
        %598 = vmatprep.subr.mxu0 0.0
        %599 = vmatpush1.msra.mxu0 0.0
        %600 = vmatprep.subr.mxu0 0.0
        %601 = vmatpush1.msra.mxu0 0.0
        %602 = vmatprep.subr.mxu0 0.0
        %603 = vmatpush1.msra.mxu0 0.0
        %604 = vmatprep.subr.mxu0 0.0
        %605 = vmatpush1.msra.mxu0 0.0
        %606 = vmatprep.subr.mxu0 0.0
        %607 = vmatpush1.msra.mxu0 0.0
        %608 = vmatprep.subr.mxu0 0.0
        %609 = vmatpush1.msra.mxu0 0.0
        %610 = vmatprep.subr.mxu0 0.0
        %611 = vmatpush1.msra.mxu0 0.0
        %612 = vmatprep.subr.mxu0 0.0
        %613 = vmatpush1.msra.mxu0 0.0
        %614 = vmatprep.subr.mxu0 0.0
        %615 = vmatpush1.msra.mxu0 0.0
        %616 = vmatprep.subr.mxu0 0.0
        %617 = vmatpush1.msra.mxu0 0.0
        %618 = vmatprep.subr.mxu0 0.0
        %619 = vmatpush1.msra.mxu0 0.0
        %620 = vmatprep.mubr.f32.mxu0 0.0
        %621 = vmatmul.mubr.f32.gmra.mrb[0].mxu0 %v258
        %v622 = vpop.f32.mrb[0].mxu0
        %v623 = vadd.f32 0.0, %v622
        %v624 = vpop.f32.mrb[0].mxu0
        %625 = vdwg.mxu0
        %626 = vmatprep.subr.mxu0 0.0
        %627 = vmatpush1.msra.mxu0 %v552
        %628 = vmatprep.subr.mxu0 0.0
        %629 = vmatpush1.msra.mxu0 %v553
        %630 = vmatprep.subr.mxu0 0.0
        %631 = vmatpush1.msra.mxu0 %v554
        %632 = vmatprep.subr.mxu0 0.0
        %633 = vmatpush1.msra.mxu0 %v555
        %634 = vmatprep.subr.mxu0 0.0
        %635 = vmatpush1.msra.mxu0 0.0
        %636 = vmatprep.subr.mxu0 0.0
        %637 = vmatpush1.msra.mxu0 0.0
        %638 = vmatprep.subr.mxu0 0.0
        %639 = vmatpush1.msra.mxu0 0.0
        %640 = vmatprep.subr.mxu0 0.0
        %641 = vmatpush1.msra.mxu0 0.0
        %642 = vmatprep.subr.mxu0 0.0
        %643 = vmatpush1.msra.mxu0 0.0
        %644 = vmatprep.subr.mxu0 0.0
        %645 = vmatpush1.msra.mxu0 0.0
        %646 = vmatprep.subr.mxu0 0.0
        %647 = vmatpush1.msra.mxu0 0.0
        %648 = vmatprep.subr.mxu0 0.0
        %649 = vmatpush1.msra.mxu0 0.0
        %650 = vmatprep.subr.mxu0 0.0
        %651 = vmatpush1.msra.mxu0 0.0
        %652 = vmatprep.subr.mxu0 0.0
        %653 = vmatpush1.msra.mxu0 0.0
        %654 = vmatprep.subr.mxu0 0.0
        %655 = vmatpush1.msra.mxu0 0.0
        %656 = vmatprep.subr.mxu0 0.0
        %657 = vmatpush1.msra.mxu0 0.0
        %658 = vmatprep.subr.mxu0 0.0
        %659 = vmatpush1.msra.mxu0 0.0
        %660 = vmatprep.subr.mxu0 0.0
        %661 = vmatpush1.msra.mxu0 0.0
        %662 = vmatprep.subr.mxu0 0.0
        %663 = vmatpush1.msra.mxu0 0.0
        %664 = vmatprep.subr.mxu0 0.0
        %665 = vmatpush1.msra.mxu0 0.0
        %666 = vmatprep.subr.mxu0 0.0
        %667 = vmatpush1.msra.mxu0 0.0
        %668 = vmatprep.subr.mxu0 0.0
        %669 = vmatpush1.msra.mxu0 0.0
        %670 = vmatprep.subr.mxu0 0.0
        %671 = vmatpush1.msra.mxu0 0.0
        %672 = vmatprep.subr.mxu0 0.0
        %673 = vmatpush1.msra.mxu0 0.0
        %674 = vmatprep.subr.mxu0 0.0
        %675 = vmatpush1.msra.mxu0 0.0
        %676 = vmatprep.subr.mxu0 0.0
        %677 = vmatpush1.msra.mxu0 0.0
        %678 = vmatprep.subr.mxu0 0.0
        %679 = vmatpush1.msra.mxu0 0.0
        %680 = vmatprep.subr.mxu0 0.0
        %681 = vmatpush1.msra.mxu0 0.0
        %682 = vmatprep.subr.mxu0 0.0
        %683 = vmatpush1.msra.mxu0 0.0
        %684 = vmatprep.subr.mxu0 0.0
        %685 = vmatpush1.msra.mxu0 0.0
        %686 = vmatprep.subr.mxu0 0.0
        %687 = vmatpush1.msra.mxu0 0.0
        %688 = vmatprep.subr.mxu0 0.0
        %689 = vmatpush1.msra.mxu0 0.0
        %690 = vmatprep.mubr.f32.mxu0 0.0
        %691 = vmatmul.mubr.f32.gmra.mrb[0].mxu0 %v258
        %v692 = vpop.f32.mrb[0].mxu0
        %v693 = vadd.f32 0.0, %v692
        %v694 = vpop.f32.mrb[0].mxu0
        %695 = vdwg.mxu0
        %vm696 = vcmask 130048
        %v698 = vsel %vm696, %v327, 0
        %v701 = vsel %vm696, %v475, 0
        %703 = vmatprep.subr.mxu0 0.0
        %704 = vmatpush1.xpose.msra.mxu0 %v701
        %705 = vmatprep.subr.mxu0 0.0
        %706 = vmatpush1.xpose.msra.mxu0 0.0
        %707 = vmatprep.subr.mxu0 0.0
        %708 = vmatpush1.xpose.msra.mxu0 0.0
        %709 = vmatprep.subr.mxu0 0.0
        %710 = vmatpush1.xpose.msra.mxu0 0.0
        %711 = vmatprep.subr.mxu0 0.0
        %712 = vmatpush1.xpose.msra.mxu0 0.0
        %713 = vmatprep.subr.mxu0 0.0
        %714 = vmatpush1.xpose.msra.mxu0 0.0
        %715 = vmatprep.subr.mxu0 0.0
        %716 = vmatpush1.xpose.msra.mxu0 0.0
        %717 = vmatprep.subr.mxu0 0.0
        %718 = vmatpush1.xpose.msra.mxu0 0.0
        %719 = vmatprep.subr.mxu0 0.0
        %720 = vmatpush1.xpose.msra.mxu0 0.0
        %721 = vmatprep.subr.mxu0 0.0
        %722 = vmatpush1.xpose.msra.mxu0 0.0
        %723 = vmatprep.subr.mxu0 0.0
        %724 = vmatpush1.xpose.msra.mxu0 0.0
        %725 = vmatprep.subr.mxu0 0.0
        %726 = vmatpush1.xpose.msra.mxu0 0.0
        %727 = vmatprep.subr.mxu0 0.0
        %728 = vmatpush1.xpose.msra.mxu0 0.0
        %729 = vmatprep.subr.mxu0 0.0
        %730 = vmatpush1.xpose.msra.mxu0 0.0
        %731 = vmatprep.subr.mxu0 0.0
        %732 = vmatpush1.xpose.msra.mxu0 0.0
        %733 = vmatprep.subr.mxu0 0.0
        %734 = vmatpush1.xpose.msra.mxu0 0.0
        %735 = vmatprep.subr.mxu0 0.0
        %736 = vmatpush1.xpose.msra.mxu0 0.0
        %737 = vmatprep.subr.mxu0 0.0
        %738 = vmatpush1.xpose.msra.mxu0 0.0
        %739 = vmatprep.subr.mxu0 0.0
        %740 = vmatpush1.xpose.msra.mxu0 0.0
        %741 = vmatprep.subr.mxu0 0.0
        %742 = vmatpush1.xpose.msra.mxu0 0.0
        %743 = vmatprep.subr.mxu0 0.0
        %744 = vmatpush1.xpose.msra.mxu0 0.0
        %745 = vmatprep.subr.mxu0 0.0
        %746 = vmatpush1.xpose.msra.mxu0 0.0
        %747 = vmatprep.subr.mxu0 0.0
        %748 = vmatpush1.xpose.msra.mxu0 0.0
        %749 = vmatprep.subr.mxu0 0.0
        %750 = vmatpush1.xpose.msra.mxu0 0.0
        %751 = vmatprep.subr.mxu0 0.0
        %752 = vmatpush1.xpose.msra.mxu0 0.0
        %753 = vmatprep.subr.mxu0 0.0
        %754 = vmatpush1.xpose.msra.mxu0 0.0
        %755 = vmatprep.subr.mxu0 0.0
        %756 = vmatpush1.xpose.msra.mxu0 0.0
        %757 = vmatprep.subr.mxu0 0.0
        %758 = vmatpush1.xpose.msra.mxu0 0.0
        %759 = vmatprep.subr.mxu0 0.0
        %760 = vmatpush1.xpose.msra.mxu0 0.0
        %761 = vmatprep.subr.mxu0 0.0
        %762 = vmatpush1.xpose.msra.mxu0 0.0
        %763 = vmatprep.subr.mxu0 0.0
        %764 = vmatpush1.xpose.msra.mxu0 0.0
        %765 = vmatprep.subr.mxu0 0.0
        %766 = vmatpush1.xpose.msra.mxu0 0.0
        %767 = vmatprep.mubr.f32.mxu0 0.0
        %768 = vmatmul.mubr.f32.gmra.mrb[0].mxu0 %v698
        %v769 = vpop.f32.mrb[0].mxu0
        %v770 = vadd.f32 0.0, %v769
        %v771 = vpop.f32.mrb[0].mxu0
        %772 = vdwg.mxu0
        %v774 = vsel %vm696, %v397, 0
        %v777 = vsel %vm696, %v545, 0
        %779 = vmatprep.subr.mxu0 0.0
        %780 = vmatpush1.xpose.msra.mxu0 %v777
        %781 = vmatprep.subr.mxu0 0.0
        %782 = vmatpush1.xpose.msra.mxu0 0.0
        %783 = vmatprep.subr.mxu0 0.0
        %784 = vmatpush1.xpose.msra.mxu0 0.0
        %785 = vmatprep.subr.mxu0 0.0
        %786 = vmatpush1.xpose.msra.mxu0 0.0
        %787 = vmatprep.subr.mxu0 0.0
        %788 = vmatpush1.xpose.msra.mxu0 0.0
        %789 = vmatprep.subr.mxu0 0.0
        %790 = vmatpush1.xpose.msra.mxu0 0.0
        %791 = vmatprep.subr.mxu0 0.0
        %792 = vmatpush1.xpose.msra.mxu0 0.0
        %793 = vmatprep.subr.mxu0 0.0
        %794 = vmatpush1.xpose.msra.mxu0 0.0
        %795 = vmatprep.subr.mxu0 0.0
        %796 = vmatpush1.xpose.msra.mxu0 0.0
        %797 = vmatprep.subr.mxu0 0.0
        %798 = vmatpush1.xpose.msra.mxu0 0.0
        %799 = vmatprep.subr.mxu0 0.0
        %800 = vmatpush1.xpose.msra.mxu0 0.0
        %801 = vmatprep.subr.mxu0 0.0
        %802 = vmatpush1.xpose.msra.mxu0 0.0
        %803 = vmatprep.subr.mxu0 0.0
        %804 = vmatpush1.xpose.msra.mxu0 0.0
        %805 = vmatprep.subr.mxu0 0.0
        %806 = vmatpush1.xpose.msra.mxu0 0.0
        %807 = vmatprep.subr.mxu0 0.0
        %808 = vmatpush1.xpose.msra.mxu0 0.0
        %809 = vmatprep.subr.mxu0 0.0
        %810 = vmatpush1.xpose.msra.mxu0 0.0
        %811 = vmatprep.subr.mxu0 0.0
        %812 = vmatpush1.xpose.msra.mxu0 0.0
        %813 = vmatprep.subr.mxu0 0.0
        %814 = vmatpush1.xpose.msra.mxu0 0.0
        %815 = vmatprep.subr.mxu0 0.0
        %816 = vmatpush1.xpose.msra.mxu0 0.0
        %817 = vmatprep.subr.mxu0 0.0
        %818 = vmatpush1.xpose.msra.mxu0 0.0
        %819 = vmatprep.subr.mxu0 0.0
        %820 = vmatpush1.xpose.msra.mxu0 0.0
        %821 = vmatprep.subr.mxu0 0.0
        %822 = vmatpush1.xpose.msra.mxu0 0.0
        %823 = vmatprep.subr.mxu0 0.0
        %824 = vmatpush1.xpose.msra.mxu0 0.0
        %825 = vmatprep.subr.mxu0 0.0
        %826 = vmatpush1.xpose.msra.mxu0 0.0
        %827 = vmatprep.subr.mxu0 0.0
        %828 = vmatpush1.xpose.msra.mxu0 0.0
        %829 = vmatprep.subr.mxu0 0.0
        %830 = vmatpush1.xpose.msra.mxu0 0.0
        %831 = vmatprep.subr.mxu0 0.0
        %832 = vmatpush1.xpose.msra.mxu0 0.0
        %833 = vmatprep.subr.mxu0 0.0
        %834 = vmatpush1.xpose.msra.mxu0 0.0
        %835 = vmatprep.subr.mxu0 0.0
        %836 = vmatpush1.xpose.msra.mxu0 0.0
        %837 = vmatprep.subr.mxu0 0.0
        %838 = vmatpush1.xpose.msra.mxu0 0.0
        %839 = vmatprep.subr.mxu0 0.0
        %840 = vmatpush1.xpose.msra.mxu0 0.0
        %841 = vmatprep.subr.mxu0 0.0
        %842 = vmatpush1.xpose.msra.mxu0 0.0
        %843 = vmatprep.mubr.f32.mxu0 0.0
        %844 = vmatmul.mubr.f32.gmra.mrb[0].mxu0 %v774
        %v845 = vpop.f32.mrb[0].mxu0
        %v846 = vadd.f32 0.0, %v845
        %v847 = vpop.f32.mrb[0].mxu0
        %848 = vdwg.mxu0
        %vm849 = vcmask 64512
        %v850 = vsel %vm849, %v770, -inf
        %851 = vmax.xlane.f32.xlu0 %v850
        %v852 = vpop.xlane.xlu0 %851
        %v853 = vsel %vm849, %v846, -inf
        %854 = vmax.xlane.f32.xlu0 %v853
        %v855 = vpop.xlane.xlu0 %854
        %v856 = vsub.f32 %v770, %v852
        %v857 = vsub.f32 %v846, %v855
        %v858 = vmul.f32 %v856, 1.442695
        %v859 = vpow.pop %v858
        %v860 = vmul.f32 %v857, 1.442695
        %v861 = vpow.pop %v860
        %v862 = vsel %vm849, %v859, 0.0
        %863 = vadd.xlane.f32.xlu0 %v862
        %v864 = vpop.xlane.xlu0 %863
        %v865 = vsel %vm849, %v861, 0.0
        %866 = vadd.xlane.f32.xlu0 %v865
        %v867 = vpop.xlane.xlu0 %866
        %v868 = vrcp.pop %v864
        %v869 = vrcp.pop %v867
        %v870 = vmul.f32 %v859, %v868
        %v871 = vmul.f32 %v861, %v869
        %v873 = vsel %vm849, %v870, 0
        %875 = vmatprep.subr.mxu0 0.0
        %876 = vmatpush1.msra.mxu0 %v623
        %877 = vmatprep.subr.mxu0 0.0
        %878 = vmatpush1.msra.mxu0 0.0
        %879 = vmatprep.subr.mxu0 0.0
        %880 = vmatpush1.msra.mxu0 0.0
        %881 = vmatprep.subr.mxu0 0.0
        %882 = vmatpush1.msra.mxu0 0.0
        %883 = vmatprep.subr.mxu0 0.0
        %884 = vmatpush1.msra.mxu0 0.0
        %885 = vmatprep.subr.mxu0 0.0
        %886 = vmatpush1.msra.mxu0 0.0
        %887 = vmatprep.subr.mxu0 0.0
        %888 = vmatpush1.msra.mxu0 0.0
        %889 = vmatprep.subr.mxu0 0.0
        %890 = vmatpush1.msra.mxu0 0.0
        %891 = vmatprep.subr.mxu0 0.0
        %892 = vmatpush1.msra.mxu0 0.0
        %893 = vmatprep.subr.mxu0 0.0
        %894 = vmatpush1.msra.mxu0 0.0
        %895 = vmatprep.subr.mxu0 0.0
        %896 = vmatpush1.msra.mxu0 0.0
        %897 = vmatprep.subr.mxu0 0.0
        %898 = vmatpush1.msra.mxu0 0.0
        %899 = vmatprep.subr.mxu0 0.0
        %900 = vmatpush1.msra.mxu0 0.0
        %901 = vmatprep.subr.mxu0 0.0
        %902 = vmatpush1.msra.mxu0 0.0
        %903 = vmatprep.subr.mxu0 0.0
        %904 = vmatpush1.msra.mxu0 0.0
        %905 = vmatprep.subr.mxu0 0.0
        %906 = vmatpush1.msra.mxu0 0.0
        %907 = vmatprep.subr.mxu0 0.0
        %908 = vmatpush1.msra.mxu0 0.0
        %909 = vmatprep.subr.mxu0 0.0
        %910 = vmatpush1.msra.mxu0 0.0
        %911 = vmatprep.subr.mxu0 0.0
        %912 = vmatpush1.msra.mxu0 0.0
        %913 = vmatprep.subr.mxu0 0.0
        %914 = vmatpush1.msra.mxu0 0.0
        %915 = vmatprep.subr.mxu0 0.0
        %916 = vmatpush1.msra.mxu0 0.0
        %917 = vmatprep.subr.mxu0 0.0
        %918 = vmatpush1.msra.mxu0 0.0
        %919 = vmatprep.subr.mxu0 0.0
        %920 = vmatpush1.msra.mxu0 0.0
        %921 = vmatprep.subr.mxu0 0.0
        %922 = vmatpush1.msra.mxu0 0.0
        %923 = vmatprep.subr.mxu0 0.0
        %924 = vmatpush1.msra.mxu0 0.0
        %925 = vmatprep.subr.mxu0 0.0
        %926 = vmatpush1.msra.mxu0 0.0
        %927 = vmatprep.subr.mxu0 0.0
        %928 = vmatpush1.msra.mxu0 0.0
        %929 = vmatprep.subr.mxu0 0.0
        %930 = vmatpush1.msra.mxu0 0.0
        %931 = vmatprep.subr.mxu0 0.0
        %932 = vmatpush1.msra.mxu0 0.0
        %933 = vmatprep.subr.mxu0 0.0
        %934 = vmatpush1.msra.mxu0 0.0
        %935 = vmatprep.subr.mxu0 0.0
        %936 = vmatpush1.msra.mxu0 0.0
        %937 = vmatprep.subr.mxu0 0.0
        %938 = vmatpush1.msra.mxu0 0.0
        %939 = vmatprep.mubr.f32.mxu0 0.0
        %940 = vmatmul.mubr.f32.gmra.mrb[0].mxu0 %v873
        %v941 = vpop.f32.mrb[0].mxu0
        %v942 = vadd.f32 0.0, %v941
        %v943 = vpop.f32.mrb[0].mxu0
        %944 = vdwg.mxu0
        %v946 = vsel %vm849, %v871, 0
        %948 = vmatprep.subr.mxu0 0.0
        %949 = vmatpush1.msra.mxu0 %v693
        %950 = vmatprep.subr.mxu0 0.0
        %951 = vmatpush1.msra.mxu0 0.0
        %952 = vmatprep.subr.mxu0 0.0
        %953 = vmatpush1.msra.mxu0 0.0
        %954 = vmatprep.subr.mxu0 0.0
        %955 = vmatpush1.msra.mxu0 0.0
        %956 = vmatprep.subr.mxu0 0.0
        %957 = vmatpush1.msra.mxu0 0.0
        %958 = vmatprep.subr.mxu0 0.0
        %959 = vmatpush1.msra.mxu0 0.0
        %960 = vmatprep.subr.mxu0 0.0
        %961 = vmatpush1.msra.mxu0 0.0
        %962 = vmatprep.subr.mxu0 0.0
        %963 = vmatpush1.msra.mxu0 0.0
        %964 = vmatprep.subr.mxu0 0.0
        %965 = vmatpush1.msra.mxu0 0.0
        %966 = vmatprep.subr.mxu0 0.0
        %967 = vmatpush1.msra.mxu0 0.0
        %968 = vmatprep.subr.mxu0 0.0
        %969 = vmatpush1.msra.mxu0 0.0
        %970 = vmatprep.subr.mxu0 0.0
        %971 = vmatpush1.msra.mxu0 0.0
        %972 = vmatprep.subr.mxu0 0.0
        %973 = vmatpush1.msra.mxu0 0.0
        %974 = vmatprep.subr.mxu0 0.0
        %975 = vmatpush1.msra.mxu0 0.0
        %976 = vmatprep.subr.mxu0 0.0
        %977 = vmatpush1.msra.mxu0 0.0
        %978 = vmatprep.subr.mxu0 0.0
        %979 = vmatpush1.msra.mxu0 0.0
        %980 = vmatprep.subr.mxu0 0.0
        %981 = vmatpush1.msra.mxu0 0.0
        %982 = vmatprep.subr.mxu0 0.0
        %983 = vmatpush1.msra.mxu0 0.0
        %984 = vmatprep.subr.mxu0 0.0
        %985 = vmatpush1.msra.mxu0 0.0
        %986 = vmatprep.subr.mxu0 0.0
        %987 = vmatpush1.msra.mxu0 0.0
        %988 = vmatprep.subr.mxu0 0.0
        %989 = vmatpush1.msra.mxu0 0.0
        %990 = vmatprep.subr.mxu0 0.0
        %991 = vmatpush1.msra.mxu0 0.0
        %992 = vmatprep.subr.mxu0 0.0
        %993 = vmatpush1.msra.mxu0 0.0
        %994 = vmatprep.subr.mxu0 0.0
        %995 = vmatpush1.msra.mxu0 0.0
        %996 = vmatprep.subr.mxu0 0.0
        %997 = vmatpush1.msra.mxu0 0.0
        %998 = vmatprep.subr.mxu0 0.0
        %999 = vmatpush1.msra.mxu0 0.0
        %1000 = vmatprep.subr.mxu0 0.0
        %1001 = vmatpush1.msra.mxu0 0.0
        %1002 = vmatprep.subr.mxu0 0.0
        %1003 = vmatpush1.msra.mxu0 0.0
        %1004 = vmatprep.subr.mxu0 0.0
        %1005 = vmatpush1.msra.mxu0 0.0
        %1006 = vmatprep.subr.mxu0 0.0
        %1007 = vmatpush1.msra.mxu0 0.0
        %1008 = vmatprep.subr.mxu0 0.0
        %1009 = vmatpush1.msra.mxu0 0.0
        %1010 = vmatprep.subr.mxu0 0.0
        %1011 = vmatpush1.msra.mxu0 0.0
        %1012 = vmatprep.mubr.f32.mxu0 0.0
        %1013 = vmatmul.mubr.f32.gmra.mrb[0].mxu0 %v946
        %v1014 = vpop.f32.mrb[0].mxu0
        %v1015 = vadd.f32 0.0, %v1014
        %v1016 = vpop.f32.mrb[0].mxu0
        %1017 = vdwg.mxu0
        %v1018 = vld [vmem:[%s4] sm:$0xff]
        %v1019 = vld [vmem:[%s4 + $0x8] sm:$0xff]
        %v1020 = vld [vmem:[%s4 + $0x10] sm:$0xff]
        %v1021 = vld [vmem:[%s4 + $0x18] sm:$0xff]
        %v1023 = vsel %vm696, %v942, 0
        %1025 = vmatprep.subr.mxu0 0.0
        %1026 = vmatpush1.msra.mxu0 %v1018
        %1027 = vmatprep.subr.mxu0 0.0
        %1028 = vmatpush1.msra.mxu0 %v1019
        %1029 = vmatprep.subr.mxu0 0.0
        %1030 = vmatpush1.msra.mxu0 0.0
        %1031 = vmatprep.subr.mxu0 0.0
        %1032 = vmatpush1.msra.mxu0 0.0
        %1033 = vmatprep.subr.mxu0 0.0
        %1034 = vmatpush1.msra.mxu0 0.0
        %1035 = vmatprep.subr.mxu0 0.0
        %1036 = vmatpush1.msra.mxu0 0.0
        %1037 = vmatprep.subr.mxu0 0.0
        %1038 = vmatpush1.msra.mxu0 0.0
        %1039 = vmatprep.subr.mxu0 0.0
        %1040 = vmatpush1.msra.mxu0 0.0
        %1041 = vmatprep.subr.mxu0 0.0
        %1042 = vmatpush1.msra.mxu0 0.0
        %1043 = vmatprep.subr.mxu0 0.0
        %1044 = vmatpush1.msra.mxu0 0.0
        %1045 = vmatprep.subr.mxu0 0.0
        %1046 = vmatpush1.msra.mxu0 0.0
        %1047 = vmatprep.subr.mxu0 0.0
        %1048 = vmatpush1.msra.mxu0 0.0
        %1049 = vmatprep.subr.mxu0 0.0
        %1050 = vmatpush1.msra.mxu0 0.0
        %1051 = vmatprep.subr.mxu0 0.0
        %1052 = vmatpush1.msra.mxu0 0.0
        %1053 = vmatprep.subr.mxu0 0.0
        %1054 = vmatpush1.msra.mxu0 0.0
        %1055 = vmatprep.subr.mxu0 0.0
        %1056 = vmatpush1.msra.mxu0 0.0
        %1057 = vmatprep.subr.mxu0 0.0
        %1058 = vmatpush1.msra.mxu0 0.0
        %1059 = vmatprep.subr.mxu0 0.0
        %1060 = vmatpush1.msra.mxu0 0.0
        %1061 = vmatprep.subr.mxu0 0.0
        %1062 = vmatpush1.msra.mxu0 0.0
        %1063 = vmatprep.subr.mxu0 0.0
        %1064 = vmatpush1.msra.mxu0 0.0
        %1065 = vmatprep.subr.mxu0 0.0
        %1066 = vmatpush1.msra.mxu0 0.0
        %1067 = vmatprep.subr.mxu0 0.0
        %1068 = vmatpush1.msra.mxu0 0.0
        %1069 = vmatprep.subr.mxu0 0.0
        %1070 = vmatpush1.msra.mxu0 0.0
        %1071 = vmatprep.subr.mxu0 0.0
        %1072 = vmatpush1.msra.mxu0 0.0
        %1073 = vmatprep.subr.mxu0 0.0
        %1074 = vmatpush1.msra.mxu0 0.0
        %1075 = vmatprep.subr.mxu0 0.0
        %1076 = vmatpush1.msra.mxu0 0.0
        %1077 = vmatprep.subr.mxu0 0.0
        %1078 = vmatpush1.msra.mxu0 0.0
        %1079 = vmatprep.subr.mxu0 0.0
        %1080 = vmatpush1.msra.mxu0 0.0
        %1081 = vmatprep.subr.mxu0 0.0
        %1082 = vmatpush1.msra.mxu0 0.0
        %1083 = vmatprep.subr.mxu0 0.0
        %1084 = vmatpush1.msra.mxu0 0.0
        %1085 = vmatprep.subr.mxu0 0.0
        %1086 = vmatpush1.msra.mxu0 0.0
        %1087 = vmatprep.subr.mxu0 0.0
        %1088 = vmatpush1.msra.mxu0 0.0
        %1089 = vmatprep.mubr.f32.mxu0 0.0
        %1090 = vmatmul.mubr.f32.gmra.mrb[0].mxu0 %v1023
        %v1091 = vpop.f32.mrb[0].mxu0
        %v1092 = vadd.f32 0.0, %v1091
        %v1093 = vpop.f32.mrb[0].mxu0
        %1094 = vdwg.mxu0
        %v1096 = vsel %vm696, %v1015, 0
        %1098 = vmatprep.subr.mxu0 0.0
        %1099 = vmatpush1.msra.mxu0 %v1020
        %1100 = vmatprep.subr.mxu0 0.0
        %1101 = vmatpush1.msra.mxu0 %v1021
        %1102 = vmatprep.subr.mxu0 0.0
        %1103 = vmatpush1.msra.mxu0 0.0
        %1104 = vmatprep.subr.mxu0 0.0
        %1105 = vmatpush1.msra.mxu0 0.0
        %1106 = vmatprep.subr.mxu0 0.0
        %1107 = vmatpush1.msra.mxu0 0.0
        %1108 = vmatprep.subr.mxu0 0.0
        %1109 = vmatpush1.msra.mxu0 0.0
        %1110 = vmatprep.subr.mxu0 0.0
        %1111 = vmatpush1.msra.mxu0 0.0
        %1112 = vmatprep.subr.mxu0 0.0
        %1113 = vmatpush1.msra.mxu0 0.0
        %1114 = vmatprep.subr.mxu0 0.0
        %1115 = vmatpush1.msra.mxu0 0.0
        %1116 = vmatprep.subr.mxu0 0.0
        %1117 = vmatpush1.msra.mxu0 0.0
        %1118 = vmatprep.subr.mxu0 0.0
        %1119 = vmatpush1.msra.mxu0 0.0
        %1120 = vmatprep.subr.mxu0 0.0
        %1121 = vmatpush1.msra.mxu0 0.0
        %1122 = vmatprep.subr.mxu0 0.0
        %1123 = vmatpush1.msra.mxu0 0.0
        %1124 = vmatprep.subr.mxu0 0.0
        %1125 = vmatpush1.msra.mxu0 0.0
        %1126 = vmatprep.subr.mxu0 0.0
        %1127 = vmatpush1.msra.mxu0 0.0
        %1128 = vmatprep.subr.mxu0 0.0
        %1129 = vmatpush1.msra.mxu0 0.0
        %1130 = vmatprep.subr.mxu0 0.0
        %1131 = vmatpush1.msra.mxu0 0.0
        %1132 = vmatprep.subr.mxu0 0.0
        %1133 = vmatpush1.msra.mxu0 0.0
        %1134 = vmatprep.subr.mxu0 0.0
        %1135 = vmatpush1.msra.mxu0 0.0
        %1136 = vmatprep.subr.mxu0 0.0
        %1137 = vmatpush1.msra.mxu0 0.0
        %1138 = vmatprep.subr.mxu0 0.0
        %1139 = vmatpush1.msra.mxu0 0.0
        %1140 = vmatprep.subr.mxu0 0.0
        %1141 = vmatpush1.msra.mxu0 0.0
        %1142 = vmatprep.subr.mxu0 0.0
        %1143 = vmatpush1.msra.mxu0 0.0
        %1144 = vmatprep.subr.mxu0 0.0
        %1145 = vmatpush1.msra.mxu0 0.0
        %1146 = vmatprep.subr.mxu0 0.0
        %1147 = vmatpush1.msra.mxu0 0.0
        %1148 = vmatprep.subr.mxu0 0.0
        %1149 = vmatpush1.msra.mxu0 0.0
        %1150 = vmatprep.subr.mxu0 0.0
        %1151 = vmatpush1.msra.mxu0 0.0
        %1152 = vmatprep.subr.mxu0 0.0
        %1153 = vmatpush1.msra.mxu0 0.0
        %1154 = vmatprep.subr.mxu0 0.0
        %1155 = vmatpush1.msra.mxu0 0.0
        %1156 = vmatprep.subr.mxu0 0.0
        %1157 = vmatpush1.msra.mxu0 0.0
        %1158 = vmatprep.subr.mxu0 0.0
        %1159 = vmatpush1.msra.mxu0 0.0
        %1160 = vmatprep.subr.mxu0 0.0
        %1161 = vmatpush1.msra.mxu0 0.0
        %1162 = vmatprep.mubr.f32.mxu0 0.0
        %1163 = vmatmul.mubr.f32.gmra.mrb[0].mxu0 %v1096
        %v1164 = vpop.f32.mrb[0].mxu0
        %v1165 = vadd.f32 0.0, %v1164
        %v1166 = vpop.f32.mrb[0].mxu0
        %1167 = vdwg.mxu0
        %v1168 = vsel %vm256, %v1092, 0.0
        %v1169 = vsel %vm256, %v1165, 0.0
        %v1170 = vadd.f32 %v1168, %v1169
        %v1171 = vld [vmem:[%s5] sm:$0x1]
        %v1173 = vlaneseq
        %v1174 = vshrl.u32 %v1173, 7
        %v1175 = vsub.s32 0, %v1174
        %v1176 = vrot.slane %v1171, %v1175
        %v1178 = vadd.f32 %v1170, %v1176
        %1179 = vst.msk [vmem:[%s242] sm:$0xff] %vm256, %v1178
        %s1180 = sand.u32 %s159, 1
        %s1181 = scalar_lea.sflag [#allocation3], %s1180
        %s1182 = sand.u32 %s159, 1
        %s1183 = smul.addr %s1182, 8
        %s1184 = scalar_lea.vmem [#allocation2], %s1183
        // Predicated region
        $region45: #{tpu_custom_call.1} parent=43 // pred_check
          %p1185 = pneg %p169
        $region46: #{tpu_custom_call.1} parent=43 // pred_check_branch
          %1187 = sbr.rel (%p1185) target = $region48
        $region47: #{tpu_custom_call.1} parent=43 // pred_region
          %s1189 = ssub.s32 128, 128
          %1190 = vsyncadd %s1181, %s1189
          %s1191 = smul.addr %s20, 128
          %s1192 = scalar_lea.hbm %s6, %s1191
          %s1194 = sshll.u32 %s1184, 4
          %s1195 = int_to_ptr.vmem [resolvable:$true] %s1194
          %1197 = dma.vmem_to_hbm [thread:$0]  %s1195, 128, %s1192, %s1181
        $region48: #{tpu_custom_call.1} parent=43 // pred_fallthru
          _
      $region44: #{tpu_custom_call.1} parent=5 // pred_fallthru
        _
      %p1198 = scmp.le.s32.totalorder 2, %s15
      // Predicated region
      $region49: #{tpu_custom_call.1} parent=5 // pred_check
        %p1199 = pneg %p1198
      $region50: #{tpu_custom_call.1} parent=5 // pred_check_branch
        %1201 = sbr.rel (%p1199) target = $region52
      $region51: #{tpu_custom_call.1} parent=5 // pred_region
        %s1202 = ssub.s32 %s15, 2
        // Predicated region
        $region53: #{tpu_custom_call.1} parent=51 // pred_check
          %p1203 = pneg %p175
        $region54: #{tpu_custom_call.1} parent=51 // pred_check_branch
          %1205 = sbr.rel (%p1203) target = $region56
        $region55: #{tpu_custom_call.1} parent=51 // pred_region
          %s1206 = sand.u32 %s160, 1
          %s1207 = scalar_lea.sflag [#allocation3], %s1206
          %s1208 = sand.u32 %s160, 1
          %s1209 = smul.addr %s1208, 8
          %s1210 = scalar_lea.vmem [#allocation2], %s1209
          %1211 = dma.done %s1207, 128
        $region56: #{tpu_custom_call.1} parent=51 // pred_fallthru
          _
      $region52: #{tpu_custom_call.1} parent=5 // pred_fallthru
        _
    $region6: #{tpu_custom_call.1} parent=1 // loop_footer
      %s19 = sadd.s32 1, %s15
    $region7: #{tpu_custom_call.1} parent=1 // loop_footer_branch
      %14 = sbr.rel target = $region3
    $region8: #{tpu_custom_call.1} parent=1 // loop_exit
      _
    %1212 = vsyncpa [#allocation3], 1
    %s1213 = scalar_lea.sflag [#allocation3], 1
    %1214 = vsyncpa %s1213, 1

</llo_original>
